<compile_context>
chip_gen: v5e
topology: v5e:2x2
jax: 0.10.0
libtpu: 0.0.40
codegen_flags: <defaults>
</compile_context>

<pallas_src>
import jax
import jax.numpy as jnp
from jax.experimental import pallas as pl
from jax.experimental.pallas import tpu as pltpu


def attention_policy_kernel(
    x_ref, xlast_ref,                       # activations
    seg_ref, segT_ref, indb_ref, indbT_ref,  # constant selector matrices
    wi_ref, bi_ref,                          # input_proj
    wkv_ref, bkv_ref, wq_ref, bq_ref, wo_ref, bo_ref,   # attention (fused/padded)
    g_ref, beta_ref,                         # LayerNorm
    w1_ref, b1_ref, w2_ref, b2_ref, w3_ref, b3_ref,     # output MLP (w3 lane-padded)
    out_ref,
):
    def mm(a, b):
        # Weights may be pre-cast to bf16 in the wrapper (v6e/v7x); accumulate in f32.
        if b.dtype != jnp.float32:
            a = a.astype(b.dtype)
        return jnp.dot(a, b, preferred_element_type=jnp.float32)

    x = x_ref[...]                # (N, OBS)   N = TB*S, batch folded into rows
    x_last = xlast_ref[...]       # (TB, OBS)
    seg = seg_ref[...]            # (N, TB)    seg[r, b] = 1 iff r // S == b
    segT = segT_ref[...]          # (TB, N)
    indb = indb_ref[...]          # (2H, nh)   indb[d, h] = 1 iff (d % H) // hd == h
    indbT = indbT_ref[...]        # (nh, 2H)

    wi, bi = wi_ref[...], bi_ref[...]

    # --- input_proj for every token (K/V need the full sequence) ---
    h = mm(x, wi) + bi                                   # (N, H)

    # --- fused K|V projection: one 64-lane-wide matmul, never lane-sliced ---
    kv = mm(h, wkv_ref[...]) + bkv_ref[...]              # (N, 2H)  [K half | V half]

    # --- last-token hidden state, recomputed from x_last (no strided row gather) ---
    h_last = mm(x_last, wi) + bi                         # (TB, H)

    # --- scaled Q for the last token, zero-padded to the 2H lane layout ---
    # (1/sqrt(hd) is folded into wq/bq in the wrapper; V-half lanes are zero)
    q_last = mm(h_last, wq_ref[...]) + bq_ref[...]       # (TB, 2H)
    # replicate each batch row across its S positions via the segment matrix
    q_rep = mm(seg, q_last)                              # (N, 2H)

    # --- per-head attention scores for the single query row, all heads at once ---
    # (kv * q_rep) holds Q·K partial products in the K-half lanes (V-half is zero);
    # INDB sums each head's group of hd lanes -> scores[r, h] = q_h · k_h(r) / sqrt(hd)
    scores = mm(kv * q_rep, indb)                        # (N, nh)

    # shift is constant per head (cancels exactly in the softmax ratio)
    m = jnp.max(scores, axis=0, keepdims=True)           # (1, nh)
    e = jnp.exp(scores - m)                              # (N, nh)

    # per-(batch, head) softmax denominators and unnormalised per-head contexts,
    # all via segment / indicator matmuls (no reshapes, no per-head slices).
    denom = mm(segT, e)                                  # (TB, nh)
    e_b = mm(e, indbT)                                   # (N, 2H)  prob broadcast to head lanes
    ctx = mm(segT, kv * e_b)                             # (TB, 2H) V-half = unnormalised context
    ctx = ctx / mm(denom, indbT)                         # exact softmax normalisation
    # W_o has zero rows for the K-half, so only the V-half context contributes.
    attended = mm(ctx, wo_ref[...]) + bo_ref[...]        # (TB, H)
    # (attention dropout is identity in eval mode)

    # --- residual + LayerNorm (eps=1e-5, biased variance, like torch) ---
    y = h_last + attended
    mu = jnp.mean(y, axis=-1, keepdims=True)
    var = jnp.mean((y - mu) ** 2, axis=-1, keepdims=True)
    yn = (y - mu) * jax.lax.rsqrt(var + 1e-5)
    yn = yn * g_ref[...] + beta_ref[...]                 # (TB, H)

    # --- output_mlp: Linear -> ReLU -> Linear -> ReLU -> Linear (lane-padded) ---
    z1 = jnp.maximum(mm(yn, w1_ref[...]) + b1_ref[...], 0.0)
    z2 = jnp.maximum(mm(z1, w2_ref[...]) + b2_ref[...], 0.0)
    out_ref[...] = mm(z2, w3_ref[...]) + b3_ref[...]     # (TB, A_pad) lane-dense store


def attention_policy_forward(x, params, num_heads=4, batch_blocks=1,
                             weights_dtype=jnp.float32):
    """batch_blocks=1 -> single grid step (best on v5e/v6e).
       batch_blocks=2 is only honoured when each block keeps a multiple of 8 batch rows
       (v7x megacore); otherwise it silently falls back to 1.
       weights_dtype=jnp.bfloat16 pre-casts matmul weights (v6e/v7x); keep f32 on v5e."""
    B, S, OBS = x.shape
    H = params["wi"].shape[1]
    A = params["w3"].shape[1]
    hd = H // num_heads
    scale = 1.0 / (hd ** 0.5)
    f32 = jnp.float32
    wd = weights_dtype

    # Megacore split only pays (and only lowers cleanly) with >=8 output rows per block.
    if B % batch_blocks != 0 or (batch_blocks > 1 and (B // batch_blocks) % 8 != 0):
        batch_blocks = 1
    TB = B // batch_blocks
    N = TB * S

    # --- fused / padded weights (built once in the wrapper) ---
    wkv = jnp.concatenate([params["wk"], params["wv"]], axis=1).astype(wd)      # (H, 2H)
    bkv = jnp.concatenate([params["bk"], params["bv"]], axis=1)                 # (1, 2H)
    wq_pad = jnp.concatenate([params["wq"] * scale, jnp.zeros((H, H), f32)],
                             axis=1).astype(wd)                                 # (H, 2H)
    bq_pad = jnp.concatenate([params["bq"] * scale, jnp.zeros((1, H), f32)], axis=1)
    wo_pad = jnp.concatenate([jnp.zeros((H, H), f32), params["wo"]],
                             axis=0).astype(wd)                                 # (2H, H)

    # Final Linear padded to a 128-lane-dense output; wrapper slices back to A.
    A_pad = max(128, ((A + 127) // 128) * 128)
    w3p = jnp.zeros((H, A_pad), f32).at[:, :A].set(params["w3"]).astype(wd)
    b3p = jnp.zeros((1, A_pad), f32).at[:, :A].set(params["b3"])

    # --- constant selector matrices (head indicator, batch segments) ---
    d = jnp.arange(2 * H)
    indb = (((d[:, None] % H) // hd) == jnp.arange(num_heads)[None, :]).astype(f32)  # (2H, nh)
    indbT = indb.T                                                                    # (nh, 2H)
    seg = ((jnp.arange(N)[:, None] // S) == jnp.arange(TB)[None, :]).astype(f32)      # (N, TB)
    segT = seg.T                                                                       # (TB, N)

    # Fold batch into rows; last-token gather hoisted out of the kernel.
    x2d = x.reshape(B * S, OBS)
    x_last = x[:, -1, :]

    plist = [seg, segT, indb, indbT,
             params["wi"].astype(wd), params["bi"],
             wkv, bkv, wq_pad, bq_pad, wo_pad, params["bo"],
             params["gamma"], params["beta"],
             params["w1"].astype(wd), params["b1"],
             params["w2"].astype(wd), params["b2"],
             w3p, b3p]

    def const_spec(p):  # VMEM-resident across grid steps (constant block index)
        return pl.BlockSpec(p.shape, lambda i: (0, 0))

    in_specs = ([pl.BlockSpec((N, OBS), lambda i: (i, 0)),
                 pl.BlockSpec((TB, OBS), lambda i: (i, 0))]
                + [const_spec(p) for p in plist])
    out_specs = pl.BlockSpec((TB, A_pad), lambda i: (i, 0))

    nh = num_heads
    flops = int(
        2 * B * S * (OBS * H + H * 2 * H)                      # input_proj + fused K|V
        + 2 * B * (OBS * H + H * 2 * H)                        # last-token h + padded Q
        + 2 * B * S * (TB * 2 * H + 2 * (2 * H) * nh + TB * (nh + 2 * H))  # selector matmuls
        + 2 * B * (nh * 2 * H + 2 * H * H)                     # denom broadcast + W_o
        + 2 * B * (H * 2 * H + 2 * H * H + H * A_pad)          # output MLP
    )
    transcendentals = B * S * nh + B * (H + 1)
    bytes_accessed = 4 * (x2d.size + x_last.size + sum(int(p.size) for p in plist)
                          + B * A_pad)
    cost = pl.CostEstimate(flops=flops, transcendentals=transcendentals,
                           bytes_accessed=bytes_accessed)

    logits_pad = pl.pallas_call(
        attention_policy_kernel,
        out_shape=jax.ShapeDtypeStruct((B, A_pad), jnp.float32),
        grid=(batch_blocks,),
        in_specs=in_specs,
        out_specs=out_specs,
        compiler_params=pltpu.CompilerParams(dimension_semantics=("parallel",)),
        cost_estimate=cost,
    )(x2d, x_last, *plist)

    new_hidden = None  # use_lstm=False
    return logits_pad[:, :A], new_hidden


def init_params(key, obs_dim, hidden, action_dim):
    """Deterministic synthetic parameters; Linear weights stored as (in, out)."""
    ks = jax.random.split(key, 16)

    def lin(k, fan_in, fan_out):
        w = jax.random.normal(k, (fan_in, fan_out), jnp.float32) * (1.0 / jnp.sqrt(fan_in))
        b = jnp.zeros((1, fan_out), jnp.float32) + 0.01
        return w, b

    p = {}
    p["wi"], p["bi"] = lin(ks[0], obs_dim, hidden)
    p["wq"], p["bq"] = lin(ks[1], hidden, hidden)
    p["wk"], p["bk"] = lin(ks[2], hidden, hidden)
    p["wv"], p["bv"] = lin(ks[3], hidden, hidden)
    p["wo"], p["bo"] = lin(ks[4], hidden, hidden)
    p["gamma"] = jnp.ones((1, hidden), jnp.float32)
    p["beta"] = jnp.zeros((1, hidden), jnp.float32)
    p["w1"], p["b1"] = lin(ks[5], hidden, hidden * 2)
    p["w2"], p["b2"] = lin(ks[6], hidden * 2, hidden)
    p["w3"], p["b3"] = lin(ks[7], hidden, action_dim)
    return p


def reference_forward(x, params, num_heads=4):
    """Pure-JAX reference mirroring the PyTorch semantics (eval mode)."""
    h = x @ params["wi"] + params["bi"]                    # (B, S, H)
    B, S, H = h.shape
    hd = H // num_heads

    def proj(w, b):
        y = h @ w + b
        return y.reshape(B, S, num_heads, hd).transpose(0, 2, 1, 3)  # (B, nh, S, hd)

    Q = proj(params["wq"], params["bq"])
    K = proj(params["wk"], params["bk"])
    V = proj(params["wv"], params["bv"])
    scores = jnp.einsum("bhqd,bhkd->bhqk", Q, K) / (hd ** 0.5)
    attn = jax.nn.softmax(scores, axis=-1)
    o = jnp.einsum("bhqk,bhkd->bhqd", attn, V)
    o = o.transpose(0, 2, 1, 3).reshape(B, S, H)
    attended = o @ params["wo"] + params["bo"]

    y = h + attended
    mu = jnp.mean(y, axis=-1, keepdims=True)
    var = jnp.mean((y - mu) ** 2, axis=-1, keepdims=True)
    yn = (y - mu) / jnp.sqrt(var + 1e-5) * params["gamma"] + params["beta"]

    last = yn[:, -1, :]
    z1 = jnp.maximum(last @ params["w1"] + params["b1"], 0.0)
    z2 = jnp.maximum(z1 @ params["w2"] + params["b2"], 0.0)
    return z2 @ params["w3"] + params["b3"]


if __name__ == "__main__":
    B, S, OBS = 2, 8, 16
    HIDDEN, NUM_HEADS, ACTION_DIM = 32, 4, 4

    key = jax.random.PRNGKey(0)
    kx, kp = jax.random.split(key)
    x = jax.random.normal(kx, (B, S, OBS), jnp.float32)
    params = init_params(kp, OBS, HIDDEN, ACTION_DIM)

    logits, new_hidden = attention_policy_forward(x, params, num_heads=NUM_HEADS)
    logits = jax.block_until_ready(logits)

    ref = reference_forward(x, params, num_heads=NUM_HEADS)
    assert logits.shape == (B, ACTION_DIM)
    assert new_hidden is None
    # All math is exact f32 (softmax uses exact division), so a tight tolerance holds.
    assert jnp.allclose(logits, ref, atol=5e-4, rtol=5e-4), (logits, ref)

    print("KERNEL_OK")
</pallas_src>

<mosaic_0001>
module attributes {stable_mosaic.version = 11 : i64} {
  func.func @attention_policy_kernel(%arg0: i32, %arg1: memref<16x16xf32, #tpu.memory_space<vmem>>, %arg2: memref<2x16xf32, #tpu.memory_space<vmem>>, %arg3: memref<16x2xf32, #tpu.memory_space<vmem>>, %arg4: memref<2x16xf32, #tpu.memory_space<vmem>>, %arg5: memref<64x4xf32, #tpu.memory_space<vmem>>, %arg6: memref<4x64xf32, #tpu.memory_space<vmem>>, %arg7: memref<16x32xf32, #tpu.memory_space<vmem>>, %arg8: memref<1x32xf32, #tpu.memory_space<vmem>>, %arg9: memref<32x64xf32, #tpu.memory_space<vmem>>, %arg10: memref<1x64xf32, #tpu.memory_space<vmem>>, %arg11: memref<32x64xf32, #tpu.memory_space<vmem>>, %arg12: memref<1x64xf32, #tpu.memory_space<vmem>>, %arg13: memref<64x32xf32, #tpu.memory_space<vmem>>, %arg14: memref<1x32xf32, #tpu.memory_space<vmem>>, %arg15: memref<1x32xf32, #tpu.memory_space<vmem>>, %arg16: memref<1x32xf32, #tpu.memory_space<vmem>>, %arg17: memref<32x64xf32, #tpu.memory_space<vmem>>, %arg18: memref<1x64xf32, #tpu.memory_space<vmem>>, %arg19: memref<64x32xf32, #tpu.memory_space<vmem>>, %arg20: memref<1x32xf32, #tpu.memory_space<vmem>>, %arg21: memref<32x128xf32, #tpu.memory_space<vmem>>, %arg22: memref<1x128xf32, #tpu.memory_space<vmem>>, %arg23: memref<2x128xf32, #tpu.memory_space<vmem>>) attributes {dimension_semantics = [#tpu.dimension_semantics<parallel>], iteration_bounds = array<i64: 1>, scalar_prefetch = 0 : i64, scratch_operands = 0 : i64, tpu.core_type = #tpu.core_type<tc>, window_params = [{transform_indices = @transform_0, window_bounds = array<i64: 16, 16>}, {transform_indices = @transform_1, window_bounds = array<i64: 2, 16>}, {pipeline_mode = #tpu.pipeline_mode<synchronous>, transform_indices = @transform_2, window_bounds = array<i64: 16, 2>}, {pipeline_mode = #tpu.pipeline_mode<synchronous>, transform_indices = @transform_3, window_bounds = array<i64: 2, 16>}, {pipeline_mode = #tpu.pipeline_mode<synchronous>, transform_indices = @transform_4, window_bounds = array<i64: 64, 4>}, {pipeline_mode = #tpu.pipeline_mode<synchronous>, transform_indices = @transform_5, window_bounds = array<i64: 4, 64>}, {pipeline_mode = #tpu.pipeline_mode<synchronous>, transform_indices = @transform_6, window_bounds = array<i64: 16, 32>}, {pipeline_mode = #tpu.pipeline_mode<synchronous>, transform_indices = @transform_7, window_bounds = array<i64: 1, 32>}, {pipeline_mode = #tpu.pipeline_mode<synchronous>, transform_indices = @transform_8, window_bounds = array<i64: 32, 64>}, {pipeline_mode = #tpu.pipeline_mode<synchronous>, transform_indices = @transform_9, window_bounds = array<i64: 1, 64>}, {pipeline_mode = #tpu.pipeline_mode<synchronous>, transform_indices = @transform_10, window_bounds = array<i64: 32, 64>}, {pipeline_mode = #tpu.pipeline_mode<synchronous>, transform_indices = @transform_11, window_bounds = array<i64: 1, 64>}, {pipeline_mode = #tpu.pipeline_mode<synchronous>, transform_indices = @transform_12, window_bounds = array<i64: 64, 32>}, {pipeline_mode = #tpu.pipeline_mode<synchronous>, transform_indices = @transform_13, window_bounds = array<i64: 1, 32>}, {pipeline_mode = #tpu.pipeline_mode<synchronous>, transform_indices = @transform_14, window_bounds = array<i64: 1, 32>}, {pipeline_mode = #tpu.pipeline_mode<synchronous>, transform_indices = @transform_15, window_bounds = array<i64: 1, 32>}, {pipeline_mode = #tpu.pipeline_mode<synchronous>, transform_indices = @transform_16, window_bounds = array<i64: 32, 64>}, {pipeline_mode = #tpu.pipeline_mode<synchronous>, transform_indices = @transform_17, window_bounds = array<i64: 1, 64>}, {pipeline_mode = #tpu.pipeline_mode<synchronous>, transform_indices = @transform_18, window_bounds = array<i64: 64, 32>}, {pipeline_mode = #tpu.pipeline_mode<synchronous>, transform_indices = @transform_19, window_bounds = array<i64: 1, 32>}, {pipeline_mode = #tpu.pipeline_mode<synchronous>, transform_indices = @transform_20, window_bounds = array<i64: 32, 128>}, {pipeline_mode = #tpu.pipeline_mode<synchronous>, transform_indices = @transform_21, window_bounds = array<i64: 1, 128>}, {transform_indices = @transform_22, window_bounds = array<i64: 2, 128>}]} {
    %c0 = arith.constant 0 : index
    %c0_0 = arith.constant 0 : index
    %0 = vector.load %arg1[%c0, %c0_0] : memref<16x16xf32, #tpu.memory_space<vmem>>, vector<16x16xf32>
    %c0_1 = arith.constant 0 : index
    %c0_2 = arith.constant 0 : index
    %1 = vector.load %arg2[%c0_1, %c0_2] : memref<2x16xf32, #tpu.memory_space<vmem>>, vector<2x16xf32>
    %c0_3 = arith.constant 0 : index
    %c0_4 = arith.constant 0 : index
    %2 = vector.load %arg3[%c0_3, %c0_4] : memref<16x2xf32, #tpu.memory_space<vmem>>, vector<16x2xf32>
    %c0_5 = arith.constant 0 : index
    %c0_6 = arith.constant 0 : index
    %3 = vector.load %arg4[%c0_5, %c0_6] : memref<2x16xf32, #tpu.memory_space<vmem>>, vector<2x16xf32>
    %c0_7 = arith.constant 0 : index
    %c0_8 = arith.constant 0 : index
    %4 = vector.load %arg5[%c0_7, %c0_8] : memref<64x4xf32, #tpu.memory_space<vmem>>, vector<64x4xf32>
    %c0_9 = arith.constant 0 : index
    %c0_10 = arith.constant 0 : index
    %5 = vector.load %arg6[%c0_9, %c0_10] : memref<4x64xf32, #tpu.memory_space<vmem>>, vector<4x64xf32>
    %c0_11 = arith.constant 0 : index
    %c0_12 = arith.constant 0 : index
    %6 = vector.load %arg7[%c0_11, %c0_12] : memref<16x32xf32, #tpu.memory_space<vmem>>, vector<16x32xf32>
    %c0_13 = arith.constant 0 : index
    %c0_14 = arith.constant 0 : index
    %7 = vector.load %arg8[%c0_13, %c0_14] : memref<1x32xf32, #tpu.memory_space<vmem>>, vector<1x32xf32>
    %cst = arith.constant dense<0.000000e+00> : vector<16x32xf32>
    %8 = tpu.matmul %0, %6, %cst {dimension_numbers = #tpu.dot_dimension_numbers<[1], [0], [0], [1], [0, 0, 1, 1], [], []>} : vector<16x16xf32>, vector<16x32xf32>, vector<16x32xf32> -> vector<16x32xf32>
    %9 = vector.broadcast %7 : vector<1x32xf32> to vector<16x32xf32>
    %10 = arith.addf %8, %9 : vector<16x32xf32>
    %c0_15 = arith.constant 0 : index
    %c0_16 = arith.constant 0 : index
    %11 = vector.load %arg9[%c0_15, %c0_16] : memref<32x64xf32, #tpu.memory_space<vmem>>, vector<32x64xf32>
    %cst_17 = arith.constant dense<0.000000e+00> : vector<16x64xf32>
    %12 = tpu.matmul %10, %11, %cst_17 {dimension_numbers = #tpu.dot_dimension_numbers<[1], [0], [0], [1], [0, 0, 1, 1], [], []>} : vector<16x32xf32>, vector<32x64xf32>, vector<16x64xf32> -> vector<16x64xf32>
    %c0_18 = arith.constant 0 : index
    %c0_19 = arith.constant 0 : index
    %13 = vector.load %arg10[%c0_18, %c0_19] : memref<1x64xf32, #tpu.memory_space<vmem>>, vector<1x64xf32>
    %14 = vector.broadcast %13 : vector<1x64xf32> to vector<16x64xf32>
    %15 = arith.addf %12, %14 : vector<16x64xf32>
    %cst_20 = arith.constant dense<0.000000e+00> : vector<2x32xf32>
    %16 = tpu.matmul %1, %6, %cst_20 {dimension_numbers = #tpu.dot_dimension_numbers<[1], [0], [0], [1], [0, 0, 1, 1], [], []>} : vector<2x16xf32>, vector<16x32xf32>, vector<2x32xf32> -> vector<2x32xf32>
    %17 = vector.broadcast %7 : vector<1x32xf32> to vector<2x32xf32>
    %18 = arith.addf %16, %17 : vector<2x32xf32>
    %c0_21 = arith.constant 0 : index
    %c0_22 = arith.constant 0 : index
    %19 = vector.load %arg11[%c0_21, %c0_22] : memref<32x64xf32, #tpu.memory_space<vmem>>, vector<32x64xf32>
    %cst_23 = arith.constant dense<0.000000e+00> : vector<2x64xf32>
    %20 = tpu.matmul %18, %19, %cst_23 {dimension_numbers = #tpu.dot_dimension_numbers<[1], [0], [0], [1], [0, 0, 1, 1], [], []>} : vector<2x32xf32>, vector<32x64xf32>, vector<2x64xf32> -> vector<2x64xf32>
    %c0_24 = arith.constant 0 : index
    %c0_25 = arith.constant 0 : index
    %21 = vector.load %arg12[%c0_24, %c0_25] : memref<1x64xf32, #tpu.memory_space<vmem>>, vector<1x64xf32>
    %22 = vector.broadcast %21 : vector<1x64xf32> to vector<2x64xf32>
    %23 = arith.addf %20, %22 : vector<2x64xf32>
    %cst_26 = arith.constant dense<0.000000e+00> : vector<16x64xf32>
    %24 = tpu.matmul %2, %23, %cst_26 {dimension_numbers = #tpu.dot_dimension_numbers<[1], [0], [0], [1], [0, 0, 1, 1], [], []>} : vector<16x2xf32>, vector<2x64xf32>, vector<16x64xf32> -> vector<16x64xf32>
    %25 = arith.mulf %15, %24 : vector<16x64xf32>
    %cst_27 = arith.constant dense<0.000000e+00> : vector<16x4xf32>
    %26 = tpu.matmul %25, %4, %cst_27 {dimension_numbers = #tpu.dot_dimension_numbers<[1], [0], [0], [1], [0, 0, 1, 1], [], []>} : vector<16x64xf32>, vector<64x4xf32>, vector<16x4xf32> -> vector<16x4xf32>
    %cst_28 = arith.constant dense<0xFF800000> : vector<4xf32>
    %27 = vector.multi_reduction <maximumf>, %26, %cst_28 [0] : vector<16x4xf32> to vector<4xf32>
    %28 = vector.shape_cast %27 : vector<4xf32> to vector<1x4xf32>
    %29 = vector.broadcast %28 : vector<1x4xf32> to vector<16x4xf32>
    %30 = arith.subf %26, %29 : vector<16x4xf32>
    %31 = math.exp %30 : vector<16x4xf32>
    %cst_29 = arith.constant dense<0.000000e+00> : vector<2x4xf32>
    %32 = tpu.matmul %3, %31, %cst_29 {dimension_numbers = #tpu.dot_dimension_numbers<[1], [0], [0], [1], [0, 0, 1, 1], [], []>} : vector<2x16xf32>, vector<16x4xf32>, vector<2x4xf32> -> vector<2x4xf32>
    %cst_30 = arith.constant dense<0.000000e+00> : vector<16x64xf32>
    %33 = tpu.matmul %31, %5, %cst_30 {dimension_numbers = #tpu.dot_dimension_numbers<[1], [0], [0], [1], [0, 0, 1, 1], [], []>} : vector<16x4xf32>, vector<4x64xf32>, vector<16x64xf32> -> vector<16x64xf32>
    %34 = arith.mulf %15, %33 : vector<16x64xf32>
    %cst_31 = arith.constant dense<0.000000e+00> : vector<2x64xf32>
    %35 = tpu.matmul %3, %34, %cst_31 {dimension_numbers = #tpu.dot_dimension_numbers<[1], [0], [0], [1], [0, 0, 1, 1], [], []>} : vector<2x16xf32>, vector<16x64xf32>, vector<2x64xf32> -> vector<2x64xf32>
    %cst_32 = arith.constant dense<0.000000e+00> : vector<2x64xf32>
    %36 = tpu.matmul %32, %5, %cst_32 {dimension_numbers = #tpu.dot_dimension_numbers<[1], [0], [0], [1], [0, 0, 1, 1], [], []>} : vector<2x4xf32>, vector<4x64xf32>, vector<2x64xf32> -> vector<2x64xf32>
    %37 = arith.divf %35, %36 : vector<2x64xf32>
    %c0_33 = arith.constant 0 : index
    %c0_34 = arith.constant 0 : index
    %38 = vector.load %arg13[%c0_33, %c0_34] : memref<64x32xf32, #tpu.memory_space<vmem>>, vector<64x32xf32>
    %cst_35 = arith.constant dense<0.000000e+00> : vector<2x32xf32>
    %39 = tpu.matmul %37, %38, %cst_35 {dimension_numbers = #tpu.dot_dimension_numbers<[1], [0], [0], [1], [0, 0, 1, 1], [], []>} : vector<2x64xf32>, vector<64x32xf32>, vector<2x32xf32> -> vector<2x32xf32>
    %c0_36 = arith.constant 0 : index
    %c0_37 = arith.constant 0 : index
    %40 = vector.load %arg14[%c0_36, %c0_37] : memref<1x32xf32, #tpu.memory_space<vmem>>, vector<1x32xf32>
    %41 = vector.broadcast %40 : vector<1x32xf32> to vector<2x32xf32>
    %42 = arith.addf %39, %41 : vector<2x32xf32>
    %43 = arith.addf %18, %42 : vector<2x32xf32>
    %cst_38 = arith.constant dense<0.000000e+00> : vector<2xf32>
    %44 = vector.multi_reduction <add>, %43, %cst_38 [1] : vector<2x32xf32> to vector<2xf32>
    %45 = vector.shape_cast %44 : vector<2xf32> to vector<2x1xf32>
    %cst_39 = arith.constant 3.200000e+01 : f32
    %46 = vector.broadcast %cst_39 : f32 to vector<2x1xf32>
    %47 = arith.divf %45, %46 : vector<2x1xf32>
    %48 = vector.broadcast %47 : vector<2x1xf32> to vector<2x32xf32>
    %49 = arith.subf %43, %48 : vector<2x32xf32>
    %50 = arith.mulf %49, %49 : vector<2x32xf32>
    %cst_40 = arith.constant dense<0.000000e+00> : vector<2xf32>
    %51 = vector.multi_reduction <add>, %50, %cst_40 [1] : vector<2x32xf32> to vector<2xf32>
    %52 = vector.shape_cast %51 : vector<2xf32> to vector<2x1xf32>
    %cst_41 = arith.constant 3.200000e+01 : f32
    %53 = vector.broadcast %cst_41 : f32 to vector<2x1xf32>
    %54 = arith.divf %52, %53 : vector<2x1xf32>
    %55 = vector.broadcast %47 : vector<2x1xf32> to vector<2x32xf32>
    %56 = arith.subf %43, %55 : vector<2x32xf32>
    %cst_42 = arith.constant 9.99999974E-6 : f32
    %57 = vector.broadcast %cst_42 : f32 to vector<2x1xf32>
    %58 = arith.addf %54, %57 : vector<2x1xf32>
    %59 = math.rsqrt %58 : vector<2x1xf32>
    %60 = vector.broadcast %59 : vector<2x1xf32> to vector<2x32xf32>
    %61 = arith.mulf %56, %60 : vector<2x32xf32>
    %c0_43 = arith.constant 0 : index
    %c0_44 = arith.constant 0 : index
    %62 = vector.load %arg15[%c0_43, %c0_44] : memref<1x32xf32, #tpu.memory_space<vmem>>, vector<1x32xf32>
    %63 = vector.broadcast %62 : vector<1x32xf32> to vector<2x32xf32>
    %64 = arith.mulf %61, %63 : vector<2x32xf32>
    %c0_45 = arith.constant 0 : index
    %c0_46 = arith.constant 0 : index
    %65 = vector.load %arg16[%c0_45, %c0_46] : memref<1x32xf32, #tpu.memory_space<vmem>>, vector<1x32xf32>
    %66 = vector.broadcast %65 : vector<1x32xf32> to vector<2x32xf32>
    %67 = arith.addf %64, %66 : vector<2x32xf32>
    %c0_47 = arith.constant 0 : index
    %c0_48 = arith.constant 0 : index
    %68 = vector.load %arg17[%c0_47, %c0_48] : memref<32x64xf32, #tpu.memory_space<vmem>>, vector<32x64xf32>
    %cst_49 = arith.constant dense<0.000000e+00> : vector<2x64xf32>
    %69 = tpu.matmul %67, %68, %cst_49 {dimension_numbers = #tpu.dot_dimension_numbers<[1], [0], [0], [1], [0, 0, 1, 1], [], []>} : vector<2x32xf32>, vector<32x64xf32>, vector<2x64xf32> -> vector<2x64xf32>
    %c0_50 = arith.constant 0 : index
    %c0_51 = arith.constant 0 : index
    %70 = vector.load %arg18[%c0_50, %c0_51] : memref<1x64xf32, #tpu.memory_space<vmem>>, vector<1x64xf32>
    %71 = vector.broadcast %70 : vector<1x64xf32> to vector<2x64xf32>
    %72 = arith.addf %69, %71 : vector<2x64xf32>
    %cst_52 = arith.constant 0.000000e+00 : f32
    %73 = vector.broadcast %cst_52 : f32 to vector<2x64xf32>
    %74 = arith.maximumf %72, %73 : vector<2x64xf32>
    %c0_53 = arith.constant 0 : index
    %c0_54 = arith.constant 0 : index
    %75 = vector.load %arg19[%c0_53, %c0_54] : memref<64x32xf32, #tpu.memory_space<vmem>>, vector<64x32xf32>
    %cst_55 = arith.constant dense<0.000000e+00> : vector<2x32xf32>
    %76 = tpu.matmul %74, %75, %cst_55 {dimension_numbers = #tpu.dot_dimension_numbers<[1], [0], [0], [1], [0, 0, 1, 1], [], []>} : vector<2x64xf32>, vector<64x32xf32>, vector<2x32xf32> -> vector<2x32xf32>
    %c0_56 = arith.constant 0 : index
    %c0_57 = arith.constant 0 : index
    %77 = vector.load %arg20[%c0_56, %c0_57] : memref<1x32xf32, #tpu.memory_space<vmem>>, vector<1x32xf32>
    %78 = vector.broadcast %77 : vector<1x32xf32> to vector<2x32xf32>
    %79 = arith.addf %76, %78 : vector<2x32xf32>
    %cst_58 = arith.constant 0.000000e+00 : f32
    %80 = vector.broadcast %cst_58 : f32 to vector<2x32xf32>
    %81 = arith.maximumf %79, %80 : vector<2x32xf32>
    %c0_59 = arith.constant 0 : index
    %c0_60 = arith.constant 0 : index
    %82 = vector.load %arg21[%c0_59, %c0_60] : memref<32x128xf32, #tpu.memory_space<vmem>>, vector<32x128xf32>
    %cst_61 = arith.constant dense<0.000000e+00> : vector<2x128xf32>
    %83 = tpu.matmul %81, %82, %cst_61 {dimension_numbers = #tpu.dot_dimension_numbers<[1], [0], [0], [1], [0, 0, 1, 1], [], []>} : vector<2x32xf32>, vector<32x128xf32>, vector<2x128xf32> -> vector<2x128xf32>
    %c0_62 = arith.constant 0 : index
    %c0_63 = arith.constant 0 : index
    %84 = vector.load %arg22[%c0_62, %c0_63] : memref<1x128xf32, #tpu.memory_space<vmem>>, vector<1x128xf32>
    %85 = vector.broadcast %84 : vector<1x128xf32> to vector<2x128xf32>
    %86 = arith.addf %83, %85 : vector<2x128xf32>
    %c0_64 = arith.constant 0 : index
    %c0_65 = arith.constant 0 : index
    %87 = vector.load %arg23[%c0_64, %c0_65] : memref<2x128xf32, #tpu.memory_space<vmem>>, vector<2x128xf32>
    tpu.vector_store %arg23[%c0_64, %c0_65], %86 {strides = array<i32>} : memref<2x128xf32, #tpu.memory_space<vmem>>, vector<2x128xf32>,
    return
  }
  func.func @transform_0(%arg0: i32) -> (i32, i32) {
    %c0_i32 = arith.constant 0 : i32
    %c0_i32_0 = arith.constant 0 : i32
    return %arg0, %c0_i32 : i32, i32
  }
  func.func @transform_1(%arg0: i32) -> (i32, i32) {
    %c0_i32 = arith.constant 0 : i32
    %c0_i32_0 = arith.constant 0 : i32
    return %arg0, %c0_i32 : i32, i32
  }
  func.func @transform_2(%arg0: i32) -> (i32, i32) {
    %c0_i32 = arith.constant 0 : i32
    %c0_i32_0 = arith.constant 0 : i32
    %c0_i32_1 = arith.constant 0 : i32
    return %c0_i32, %c0_i32_0 : i32, i32
  }
  func.func @transform_3(%arg0: i32) -> (i32, i32) {
    %c0_i32 = arith.constant 0 : i32
    %c0_i32_0 = arith.constant 0 : i32
    %c0_i32_1 = arith.constant 0 : i32
    return %c0_i32, %c0_i32_0 : i32, i32
  }
  func.func @transform_4(%arg0: i32) -> (i32, i32) {
    %c0_i32 = arith.constant 0 : i32
    %c0_i32_0 = arith.constant 0 : i32
    %c0_i32_1 = arith.constant 0 : i32
    return %c0_i32, %c0_i32_0 : i32, i32
  }
  func.func @transform_5(%arg0: i32) -> (i32, i32) {
    %c0_i32 = arith.constant 0 : i32
    %c0_i32_0 = arith.constant 0 : i32
    %c0_i32_1 = arith.constant 0 : i32
    return %c0_i32, %c0_i32_0 : i32, i32
  }
  func.func @transform_6(%arg0: i32) -> (i32, i32) {
    %c0_i32 = arith.constant 0 : i32
    %c0_i32_0 = arith.constant 0 : i32
    %c0_i32_1 = arith.constant 0 : i32
    return %c0_i32, %c0_i32_0 : i32, i32
  }
  func.func @transform_7(%arg0: i32) -> (i32, i32) {
    %c0_i32 = arith.constant 0 : i32
    %c0_i32_0 = arith.constant 0 : i32
    %c0_i32_1 = arith.constant 0 : i32
    return %c0_i32, %c0_i32_0 : i32, i32
  }
  func.func @transform_8(%arg0: i32) -> (i32, i32) {
    %c0_i32 = arith.constant 0 : i32
    %c0_i32_0 = arith.constant 0 : i32
    %c0_i32_1 = arith.constant 0 : i32
    return %c0_i32, %c0_i32_0 : i32, i32
  }
  func.func @transform_9(%arg0: i32) -> (i32, i32) {
    %c0_i32 = arith.constant 0 : i32
    %c0_i32_0 = arith.constant 0 : i32
    %c0_i32_1 = arith.constant 0 : i32
    return %c0_i32, %c0_i32_0 : i32, i32
  }
  func.func @transform_10(%arg0: i32) -> (i32, i32) {
    %c0_i32 = arith.constant 0 : i32
    %c0_i32_0 = arith.constant 0 : i32
    %c0_i32_1 = arith.constant 0 : i32
    return %c0_i32, %c0_i32_0 : i32, i32
  }
  func.func @transform_11(%arg0: i32) -> (i32, i32) {
    %c0_i32 = arith.constant 0 : i32
    %c0_i32_0 = arith.constant 0 : i32
    %c0_i32_1 = arith.constant 0 : i32
    return %c0_i32, %c0_i32_0 : i32, i32
  }
  func.func @transform_12(%arg0: i32) -> (i32, i32) {
    %c0_i32 = arith.constant 0 : i32
    %c0_i32_0 = arith.constant 0 : i32
    %c0_i32_1 = arith.constant 0 : i32
    return %c0_i32, %c0_i32_0 : i32, i32
  }
  func.func @transform_13(%arg0: i32) -> (i32, i32) {
    %c0_i32 = arith.constant 0 : i32
    %c0_i32_0 = arith.constant 0 : i32
    %c0_i32_1 = arith.constant 0 : i32
    return %c0_i32, %c0_i32_0 : i32, i32
  }
  func.func @transform_14(%arg0: i32) -> (i32, i32) {
    %c0_i32 = arith.constant 0 : i32
    %c0_i32_0 = arith.constant 0 : i32
    %c0_i32_1 = arith.constant 0 : i32
    return %c0_i32, %c0_i32_0 : i32, i32
  }
  func.func @transform_15(%arg0: i32) -> (i32, i32) {
    %c0_i32 = arith.constant 0 : i32
    %c0_i32_0 = arith.constant 0 : i32
    %c0_i32_1 = arith.constant 0 : i32
    return %c0_i32, %c0_i32_0 : i32, i32
  }
  func.func @transform_16(%arg0: i32) -> (i32, i32) {
    %c0_i32 = arith.constant 0 : i32
    %c0_i32_0 = arith.constant 0 : i32
    %c0_i32_1 = arith.constant 0 : i32
    return %c0_i32, %c0_i32_0 : i32, i32
  }
  func.func @transform_17(%arg0: i32) -> (i32, i32) {
    %c0_i32 = arith.constant 0 : i32
    %c0_i32_0 = arith.constant 0 : i32
    %c0_i32_1 = arith.constant 0 : i32
    return %c0_i32, %c0_i32_0 : i32, i32
  }
  func.func @transform_18(%arg0: i32) -> (i32, i32) {
    %c0_i32 = arith.constant 0 : i32
    %c0_i32_0 = arith.constant 0 : i32
    %c0_i32_1 = arith.constant 0 : i32
    return %c0_i32, %c0_i32_0 : i32, i32
  }
  func.func @transform_19(%arg0: i32) -> (i32, i32) {
    %c0_i32 = arith.constant 0 : i32
    %c0_i32_0 = arith.constant 0 : i32
    %c0_i32_1 = arith.constant 0 : i32
    return %c0_i32, %c0_i32_0 : i32, i32
  }
  func.func @transform_20(%arg0: i32) -> (i32, i32) {
    %c0_i32 = arith.constant 0 : i32
    %c0_i32_0 = arith.constant 0 : i32
    %c0_i32_1 = arith.constant 0 : i32
    return %c0_i32, %c0_i32_0 : i32, i32
  }
  func.func @transform_21(%arg0: i32) -> (i32, i32) {
    %c0_i32 = arith.constant 0 : i32
    %c0_i32_0 = arith.constant 0 : i32
    %c0_i32_1 = arith.constant 0 : i32
    return %c0_i32, %c0_i32_0 : i32, i32
  }
  func.func @transform_22(%arg0: i32) -> (i32, i32) {
    %c0_i32 = arith.constant 0 : i32
    %c0_i32_0 = arith.constant 0 : i32
    return %arg0, %c0_i32 : i32, i32
  }
}

</mosaic_0001>

<llo_original>
// kernel: tpu_custom_call.1
$region0: #{tpu_custom_call.1}
  #allocation0 [shape = 'u32[]', space=smem, size = 0x4, offset = 0x4, fixed_abs, tag = 'smem constant byte address 0x4 - core index']
  #allocation1 [shape = 'u32[72,128]{1,0:T(1,128)}', space=vmem, size = 0x9000, scoped, tag = 'internal scratch']
  %s0 = inlined_call_operand.vmem [shape: f32[16,16], index: 0, kind: input, shape index: {}]
  %s1 = inlined_call_operand.vmem [shape: f32[2,16], index: 1, kind: input, shape index: {}]
  %s2 = inlined_call_operand.vmem [shape: f32[16,2], index: 2, kind: input, shape index: {}]
  %s3 = inlined_call_operand.vmem [shape: f32[2,16], index: 3, kind: input, shape index: {}]
  %s4 = inlined_call_operand.vmem [shape: f32[64,4], index: 4, kind: input, shape index: {}]
  %s5 = inlined_call_operand.vmem [shape: f32[4,64], index: 5, kind: input, shape index: {}]
  %s6 = inlined_call_operand.vmem [shape: f32[16,32], index: 6, kind: input, shape index: {}]
  %s7 = inlined_call_operand.vmem [shape: f32[1,32], index: 7, kind: input, shape index: {}]
  %s8 = inlined_call_operand.vmem [shape: f32[32,64], index: 8, kind: input, shape index: {}]
  %s9 = inlined_call_operand.vmem [shape: f32[1,64], index: 9, kind: input, shape index: {}]
  %s10 = inlined_call_operand.vmem [shape: f32[32,64], index: 10, kind: input, shape index: {}]
  %s11 = inlined_call_operand.vmem [shape: f32[1,64], index: 11, kind: input, shape index: {}]
  %s12 = inlined_call_operand.vmem [shape: f32[64,32], index: 12, kind: input, shape index: {}]
  %s13 = inlined_call_operand.vmem [shape: f32[1,32], index: 13, kind: input, shape index: {}]
  %s14 = inlined_call_operand.vmem [shape: f32[1,32], index: 14, kind: input, shape index: {}]
  %s15 = inlined_call_operand.vmem [shape: f32[1,32], index: 15, kind: input, shape index: {}]
  %s16 = inlined_call_operand.vmem [shape: f32[32,64], index: 16, kind: input, shape index: {}]
  %s17 = inlined_call_operand.vmem [shape: f32[1,64], index: 17, kind: input, shape index: {}]
  %s18 = inlined_call_operand.vmem [shape: f32[64,32], index: 18, kind: input, shape index: {}]
  %s19 = inlined_call_operand.vmem [shape: f32[1,32], index: 19, kind: input, shape index: {}]
  %s20 = inlined_call_operand.vmem [shape: f32[32,128], index: 20, kind: input, shape index: {}]
  %s21 = inlined_call_operand.vmem [shape: f32[1,128], index: 21, kind: input, shape index: {}]
  %s22 = inlined_call_operand.hbm [shape: f32[2,128], index: 22, kind: output, shape index: {}]
  %s23 = sld [smem:[#allocation0]]
  $region98: #{tpu_custom_call.1} parent=0
    _
  %s25 = ssub.s32 1, %s23
  %s26 = scalar_select 0, %s25, %s23
  $region1: #{tpu_custom_call.1} parent=0
    #allocation2 [shape = 'u8[1024]{0}', space=vmem, size = 0x400, scoped, tag = 'output window, operand 0, single buffered']
    #allocation3 [shape = 's32[1]{0}', space=sflag, size = 0x4, scoped, tag = 'scoped memory for tpu_custom_call.1']
    %27 = vsyncpa [#allocation3], 0
    // Predicated region
    $region2: #{tpu_custom_call.1} parent=1 // pred_check
      _
    $region3: #{tpu_custom_call.1} parent=1 // pred_check_branch
      %29 = sbr.rel (0) target = $region5
    $region4: #{tpu_custom_call.1} parent=1 // pred_region
      _
    $region5: #{tpu_custom_call.1} parent=1 // pred_fallthru
      _
    // Predicated region
    $region6: #{tpu_custom_call.1} parent=1 // pred_check
      _
    $region7: #{tpu_custom_call.1} parent=1 // pred_check_branch
      %31 = sbr.rel (0) target = $region9
    $region8: #{tpu_custom_call.1} parent=1 // pred_region
      _
    $region9: #{tpu_custom_call.1} parent=1 // pred_fallthru
      _
    // Predicated region
    $region10: #{tpu_custom_call.1} parent=1 // pred_check
      _
    $region11: #{tpu_custom_call.1} parent=1 // pred_check_branch
      %33 = sbr.rel (0) target = $region13
    $region12: #{tpu_custom_call.1} parent=1 // pred_region
      _
    $region13: #{tpu_custom_call.1} parent=1 // pred_fallthru
      _
    // Predicated region
    $region14: #{tpu_custom_call.1} parent=1 // pred_check
      _
    $region15: #{tpu_custom_call.1} parent=1 // pred_check_branch
      %35 = sbr.rel (0) target = $region17
    $region16: #{tpu_custom_call.1} parent=1 // pred_region
      _
    $region17: #{tpu_custom_call.1} parent=1 // pred_fallthru
      _
    // Predicated region
    $region18: #{tpu_custom_call.1} parent=1 // pred_check
      _
    $region19: #{tpu_custom_call.1} parent=1 // pred_check_branch
      %37 = sbr.rel (0) target = $region21
    $region20: #{tpu_custom_call.1} parent=1 // pred_region
      _
    $region21: #{tpu_custom_call.1} parent=1 // pred_fallthru
      _
    // Predicated region
    $region22: #{tpu_custom_call.1} parent=1 // pred_check
      _
    $region23: #{tpu_custom_call.1} parent=1 // pred_check_branch
      %39 = sbr.rel (0) target = $region25
    $region24: #{tpu_custom_call.1} parent=1 // pred_region
      _
    $region25: #{tpu_custom_call.1} parent=1 // pred_fallthru
      _
    // Predicated region
    $region26: #{tpu_custom_call.1} parent=1 // pred_check
      _
    $region27: #{tpu_custom_call.1} parent=1 // pred_check_branch
      %41 = sbr.rel (0) target = $region29
    $region28: #{tpu_custom_call.1} parent=1 // pred_region
      _
    $region29: #{tpu_custom_call.1} parent=1 // pred_fallthru
      _
    // Predicated region
    $region30: #{tpu_custom_call.1} parent=1 // pred_check
      _
    $region31: #{tpu_custom_call.1} parent=1 // pred_check_branch
      %43 = sbr.rel (0) target = $region33
    $region32: #{tpu_custom_call.1} parent=1 // pred_region
      _
    $region33: #{tpu_custom_call.1} parent=1 // pred_fallthru
      _
    // Predicated region
    $region34: #{tpu_custom_call.1} parent=1 // pred_check
      _
    $region35: #{tpu_custom_call.1} parent=1 // pred_check_branch
      %45 = sbr.rel (0) target = $region37
    $region36: #{tpu_custom_call.1} parent=1 // pred_region
      _
    $region37: #{tpu_custom_call.1} parent=1 // pred_fallthru
      _
    // Predicated region
    $region38: #{tpu_custom_call.1} parent=1 // pred_check
      _
    $region39: #{tpu_custom_call.1} parent=1 // pred_check_branch
      %47 = sbr.rel (0) target = $region41
    $region40: #{tpu_custom_call.1} parent=1 // pred_region
      _
    $region41: #{tpu_custom_call.1} parent=1 // pred_fallthru
      _
    // Predicated region
    $region42: #{tpu_custom_call.1} parent=1 // pred_check
      _
    $region43: #{tpu_custom_call.1} parent=1 // pred_check_branch
      %49 = sbr.rel (0) target = $region45
    $region44: #{tpu_custom_call.1} parent=1 // pred_region
      _
    $region45: #{tpu_custom_call.1} parent=1 // pred_fallthru
      _
    // Predicated region
    $region46: #{tpu_custom_call.1} parent=1 // pred_check
      _
    $region47: #{tpu_custom_call.1} parent=1 // pred_check_branch
      %51 = sbr.rel (0) target = $region49
    $region48: #{tpu_custom_call.1} parent=1 // pred_region
      _
    $region49: #{tpu_custom_call.1} parent=1 // pred_fallthru
      _
    // Predicated region
    $region50: #{tpu_custom_call.1} parent=1 // pred_check
      _
    $region51: #{tpu_custom_call.1} parent=1 // pred_check_branch
      %53 = sbr.rel (0) target = $region53
    $region52: #{tpu_custom_call.1} parent=1 // pred_region
      _
    $region53: #{tpu_custom_call.1} parent=1 // pred_fallthru
      _
    // Predicated region
    $region54: #{tpu_custom_call.1} parent=1 // pred_check
      _
    $region55: #{tpu_custom_call.1} parent=1 // pred_check_branch
      %55 = sbr.rel (0) target = $region57
    $region56: #{tpu_custom_call.1} parent=1 // pred_region
      _
    $region57: #{tpu_custom_call.1} parent=1 // pred_fallthru
      _
    // Predicated region
    $region58: #{tpu_custom_call.1} parent=1 // pred_check
      _
    $region59: #{tpu_custom_call.1} parent=1 // pred_check_branch
      %57 = sbr.rel (0) target = $region61
    $region60: #{tpu_custom_call.1} parent=1 // pred_region
      _
    $region61: #{tpu_custom_call.1} parent=1 // pred_fallthru
      _
    // Predicated region
    $region62: #{tpu_custom_call.1} parent=1 // pred_check
      _
    $region63: #{tpu_custom_call.1} parent=1 // pred_check_branch
      %59 = sbr.rel (0) target = $region65
    $region64: #{tpu_custom_call.1} parent=1 // pred_region
      _
    $region65: #{tpu_custom_call.1} parent=1 // pred_fallthru
      _
    // Predicated region
    $region66: #{tpu_custom_call.1} parent=1 // pred_check
      _
    $region67: #{tpu_custom_call.1} parent=1 // pred_check_branch
      %61 = sbr.rel (0) target = $region69
    $region68: #{tpu_custom_call.1} parent=1 // pred_region
      _
    $region69: #{tpu_custom_call.1} parent=1 // pred_fallthru
      _
    // Predicated region
    $region70: #{tpu_custom_call.1} parent=1 // pred_check
      _
    $region71: #{tpu_custom_call.1} parent=1 // pred_check_branch
      %63 = sbr.rel (0) target = $region73
    $region72: #{tpu_custom_call.1} parent=1 // pred_region
      _
    $region73: #{tpu_custom_call.1} parent=1 // pred_fallthru
      _
    // Predicated region
    $region74: #{tpu_custom_call.1} parent=1 // pred_check
      _
    $region75: #{tpu_custom_call.1} parent=1 // pred_check_branch
      %65 = sbr.rel (0) target = $region77
    $region76: #{tpu_custom_call.1} parent=1 // pred_region
      _
    $region77: #{tpu_custom_call.1} parent=1 // pred_fallthru
      _
    // Predicated region
    $region78: #{tpu_custom_call.1} parent=1 // pred_check
      _
    $region79: #{tpu_custom_call.1} parent=1 // pred_check_branch
      %67 = sbr.rel (0) target = $region81
    $region80: #{tpu_custom_call.1} parent=1 // pred_region
      _
    $region81: #{tpu_custom_call.1} parent=1 // pred_fallthru
      _
    // Predicated region
    $region82: #{tpu_custom_call.1} parent=1 // pred_check
      _
    $region83: #{tpu_custom_call.1} parent=1 // pred_check_branch
      %69 = sbr.rel (0) target = $region85
    $region84: #{tpu_custom_call.1} parent=1 // pred_region
      _
    $region85: #{tpu_custom_call.1} parent=1 // pred_fallthru
      _
    // Predicated region
    $region86: #{tpu_custom_call.1} parent=1 // pred_check
      _
    $region87: #{tpu_custom_call.1} parent=1 // pred_check_branch
      %71 = sbr.rel (0) target = $region89
    $region88: #{tpu_custom_call.1} parent=1 // pred_region
      _
    $region89: #{tpu_custom_call.1} parent=1 // pred_fallthru
      _
    %v72 = vld [vmem:[%s0] sm:$0xff]
    %v73 = vld [vmem:[%s0 + $0x8] sm:$0xff]
    %v74 = vld [vmem:[%s1] sm:$0x3]
    %v75 = vld [vmem:[%s2] sm:$0xff]
    %v76 = vld [vmem:[%s2 + $0x8] sm:$0xff]
    %v77 = vld [vmem:[%s3] sm:$0x3]
    %v78 = vld [vmem:[%s4] sm:$0xff]
    %v79 = vld [vmem:[%s4 + $0x8] sm:$0xff]
    %v80 = vld [vmem:[%s4 + $0x10] sm:$0xff]
    %v81 = vld [vmem:[%s4 + $0x18] sm:$0xff]
    %v82 = vld [vmem:[%s4 + $0x20] sm:$0xff]
    %v83 = vld [vmem:[%s4 + $0x28] sm:$0xff]
    %v84 = vld [vmem:[%s4 + $0x30] sm:$0xff]
    %v85 = vld [vmem:[%s4 + $0x38] sm:$0xff]
    %v86 = vld [vmem:[%s5] sm:$0xf]
    %v87 = vld [vmem:[%s6] sm:$0xff]
    %v88 = vld [vmem:[%s6 + $0x8] sm:$0xff]
    %v89 = vld [vmem:[%s7] sm:$0x1]
    %v91 = vperm.slane %v89, 0
    %vm93 = vcmask 130048
    %v95 = vsel %vm93, %v72, 0
    %v98 = vsel %vm93, %v73, 0
    %100 = vmatpush.msra.mxu0 0.0
    %101 = vmatpush.msra.mxu0 0.0
    %102 = vmatpush.msra.mxu0 0.0
    %103 = vmatpush.msra.mxu0 0.0
    %104 = vmatpush.msra.mxu0 0.0
    %105 = vmatpush.msra.mxu0 0.0
    %106 = vmatpush.msra.mxu0 0.0
    %107 = vmatpush.msra.mxu0 0.0
    %108 = vmatpush.msra.mxu0 0.0
    %109 = vmatpush.msra.mxu0 0.0
    %110 = vmatpush.msra.mxu0 0.0
    %111 = vmatpush.msra.mxu0 0.0
    %112 = vmatpush.msra.mxu0 0.0
    %113 = vmatpush.msra.mxu0 0.0
    %114 = vmatpush.msra.mxu0 %v88
    %115 = vmatpush.msra.mxu0 %v87
    %116 = vmatmul.f32.gmra.mxu0 %v95
    %v117 = vpop.f32.mrf.mxu0
    %v118 = vadd.f32 %v91, %v117
    %119 = vmatmul.f32.gmra.mxu0 %v98
    %v120 = vpop.f32.mrf.mxu0
    %v121 = vadd.f32 %v91, %v120
    %122 = vdwg.mxu0
    %v123 = vld [vmem:[%s8] sm:$0xff]
    %v124 = vld [vmem:[%s8 + $0x8] sm:$0xff]
    %v125 = vld [vmem:[%s8 + $0x10] sm:$0xff]
    %v126 = vld [vmem:[%s8 + $0x18] sm:$0xff]
    %v127 = vld [vmem:[%s9] sm:$0x1]
    %v129 = vperm.slane %v127, 0
    %vm131 = vcmask 261120
    %v133 = vsel %vm131, %v118, 0
    %v136 = vsel %vm131, %v121, 0
    %138 = vmatpush.msra.mxu0 0.0
    %139 = vmatpush.msra.mxu0 0.0
    %140 = vmatpush.msra.mxu0 0.0
    %141 = vmatpush.msra.mxu0 0.0
    %142 = vmatpush.msra.mxu0 0.0
    %143 = vmatpush.msra.mxu0 0.0
    %144 = vmatpush.msra.mxu0 0.0
    %145 = vmatpush.msra.mxu0 0.0
    %146 = vmatpush.msra.mxu0 0.0
    %147 = vmatpush.msra.mxu0 0.0
    %148 = vmatpush.msra.mxu0 0.0
    %149 = vmatpush.msra.mxu0 0.0
    %150 = vmatpush.msra.mxu0 %v126
    %151 = vmatpush.msra.mxu0 %v125
    %152 = vmatpush.msra.mxu0 %v124
    %153 = vmatpush.msra.mxu0 %v123
    %154 = vmatmul.f32.gmra.mxu0 %v133
    %v155 = vpop.f32.mrf.mxu0
    %v156 = vadd.f32 %v129, %v155
    %157 = vmatmul.f32.gmra.mxu0 %v136
    %v158 = vpop.f32.mrf.mxu0
    %v159 = vadd.f32 %v129, %v158
    %160 = vdwg.mxu0
    %v162 = vsel %vm93, %v74, 0
    %164 = vmatpush.msra.mxu0 0.0
    %165 = vmatpush.msra.mxu0 0.0
    %166 = vmatpush.msra.mxu0 0.0
    %167 = vmatpush.msra.mxu0 0.0
    %168 = vmatpush.msra.mxu0 0.0
    %169 = vmatpush.msra.mxu0 0.0
    %170 = vmatpush.msra.mxu0 0.0
    %171 = vmatpush.msra.mxu0 0.0
    %172 = vmatpush.msra.mxu0 0.0
    %173 = vmatpush.msra.mxu0 0.0
    %174 = vmatpush.msra.mxu0 0.0
    %175 = vmatpush.msra.mxu0 0.0
    %176 = vmatpush.msra.mxu0 0.0
    %177 = vmatpush.msra.mxu0 0.0
    %178 = vmatpush.msra.mxu0 %v88
    %179 = vmatpush.msra.mxu0 %v87
    %180 = vmatmul.f32.gmra.mxu0 %v162
    %v181 = vpop.f32.mrf.mxu0
    %v182 = vadd.f32 %v91, %v181
    %183 = vdwg.mxu0
    %v184 = vld [vmem:[%s10] sm:$0xff]
    %v185 = vld [vmem:[%s10 + $0x8] sm:$0xff]
    %v186 = vld [vmem:[%s10 + $0x10] sm:$0xff]
    %v187 = vld [vmem:[%s10 + $0x18] sm:$0xff]
    %v188 = vld [vmem:[%s11] sm:$0x1]
    %v190 = vperm.slane %v188, 0
    %v193 = vsel %vm131, %v182, 0
    %195 = vmatpush.msra.mxu0 0.0
    %196 = vmatpush.msra.mxu0 0.0
    %197 = vmatpush.msra.mxu0 0.0
    %198 = vmatpush.msra.mxu0 0.0
    %199 = vmatpush.msra.mxu0 0.0
    %200 = vmatpush.msra.mxu0 0.0
    %201 = vmatpush.msra.mxu0 0.0
    %202 = vmatpush.msra.mxu0 0.0
    %203 = vmatpush.msra.mxu0 0.0
    %204 = vmatpush.msra.mxu0 0.0
    %205 = vmatpush.msra.mxu0 0.0
    %206 = vmatpush.msra.mxu0 0.0
    %207 = vmatpush.msra.mxu0 %v187
    %208 = vmatpush.msra.mxu0 %v186
    %209 = vmatpush.msra.mxu0 %v185
    %210 = vmatpush.msra.mxu0 %v184
    %211 = vmatmul.f32.gmra.mxu0 %v193
    %v212 = vpop.f32.mrf.mxu0
    %v213 = vadd.f32 %v190, %v212
    %214 = vdwg.mxu0
    %vm215 = vcmask 15360
    %v217 = vsel %vm215, %v75, 0
    %v220 = vsel %vm215, %v76, 0
    %vm222 = vcmask 1041408
    %v224 = vsel %vm222, %v213, 0
    %226 = vmatpush.msra.mxu0 0.0
    %227 = vmatpush.msra.mxu0 0.0
    %228 = vmatpush.msra.mxu0 0.0
    %229 = vmatpush.msra.mxu0 0.0
    %230 = vmatpush.msra.mxu0 0.0
    %231 = vmatpush.msra.mxu0 0.0
    %232 = vmatpush.msra.mxu0 0.0
    %233 = vmatpush.msra.mxu0 0.0
    %234 = vmatpush.msra.mxu0 0.0
    %235 = vmatpush.msra.mxu0 0.0
    %236 = vmatpush.msra.mxu0 0.0
    %237 = vmatpush.msra.mxu0 0.0
    %238 = vmatpush.msra.mxu0 0.0
    %239 = vmatpush.msra.mxu0 0.0
    %240 = vmatpush.msra.mxu0 0.0
    %241 = vmatpush.msra.mxu0 %v224
    %242 = vmatmul.f32.gmra.mxu0 %v217
    %v243 = vpop.f32.mrf.mxu0
    %v244 = vadd.f32 0.0, %v243
    %245 = vmatmul.f32.gmra.mxu0 %v220
    %v246 = vpop.f32.mrf.mxu0
    %v247 = vadd.f32 0.0, %v246
    %248 = vdwg.mxu0
    %v249 = vmul.f32 %v156, %v244
    %v250 = vmul.f32 %v159, %v247
    %vm251 = vcmask 523264
    %v253 = vsel %vm251, %v249, 0
    %v256 = vsel %vm251, %v250, 0
    %258 = vmatpush.msra.mxu0 0.0
    %259 = vmatpush.msra.mxu0 0.0
    %260 = vmatpush.msra.mxu0 0.0
    %261 = vmatpush.msra.mxu0 0.0
    %262 = vmatpush.msra.mxu0 0.0
    %263 = vmatpush.msra.mxu0 0.0
    %264 = vmatpush.msra.mxu0 0.0
    %265 = vmatpush.msra.mxu0 0.0
    %266 = vmatpush.msra.mxu0 %v85
    %267 = vmatpush.msra.mxu0 %v84
    %268 = vmatpush.msra.mxu0 %v83
    %269 = vmatpush.msra.mxu0 %v82
    %270 = vmatpush.msra.mxu0 %v81
    %271 = vmatpush.msra.mxu0 %v80
    %272 = vmatpush.msra.mxu0 %v79
    %273 = vmatpush.msra.mxu0 %v78
    %274 = vmatmul.f32.gmra.mxu0 %v253
    %v275 = vpop.f32.mrf.mxu0
    %v276 = vadd.f32 0.0, %v275
    %277 = vmatmul.f32.gmra.mxu0 %v256
    %v278 = vpop.f32.mrf.mxu0
    %v279 = vadd.f32 0.0, %v278
    %280 = vdwg.mxu0
    %vm281 = vcmask 31744
    %v282 = vsel %vm281, %v276, -inf
    %v283 = vsel %vm281, %v279, -inf
    %v284 = vmax.f32 %v282, %v283
    %v285 = vrot.slane %v284, 4
    %v286 = vmax.f32 %v284, %v285
    %v287 = vrot.slane %v286, 2
    %v288 = vmax.f32 %v286, %v287
    %v289 = vrot.slane %v288, 1
    %v290 = vmax.f32 %v288, %v289
    %v291 = vsub.f32 %v276, %v290
    %v292 = vsub.f32 %v279, %v290
    %v293 = vmul.f32 %v291, 1.442695
    %v294 = vpow.pop %v293
    %v295 = vmul.f32 %v292, 1.442695
    %v296 = vpow.pop %v295
    %v298 = vsel %vm93, %v77, 0
    %300 = vmatpush.msra.mxu0 0.0
    %301 = vmatpush.msra.mxu0 0.0
    %302 = vmatpush.msra.mxu0 0.0
    %303 = vmatpush.msra.mxu0 0.0
    %304 = vmatpush.msra.mxu0 0.0
    %305 = vmatpush.msra.mxu0 0.0
    %306 = vmatpush.msra.mxu0 0.0
    %307 = vmatpush.msra.mxu0 0.0
    %308 = vmatpush.msra.mxu0 0.0
    %309 = vmatpush.msra.mxu0 0.0
    %310 = vmatpush.msra.mxu0 0.0
    %311 = vmatpush.msra.mxu0 0.0
    %312 = vmatpush.msra.mxu0 0.0
    %313 = vmatpush.msra.mxu0 0.0
    %314 = vmatpush.msra.mxu0 %v296
    %315 = vmatpush.msra.mxu0 %v294
    %316 = vmatmul.f32.gmra.mxu0 %v298
    %v317 = vpop.f32.mrf.mxu0
    %v318 = vadd.f32 0.0, %v317
    %319 = vdwg.mxu0
    %v321 = vsel %vm281, %v294, 0
    %v324 = vsel %vm281, %v296, 0
    %vm326 = vcmask 1043456
    %v328 = vsel %vm326, %v86, 0
    %330 = vmatpush.msra.mxu0 0.0
    %331 = vmatpush.msra.mxu0 0.0
    %332 = vmatpush.msra.mxu0 0.0
    %333 = vmatpush.msra.mxu0 0.0
    %334 = vmatpush.msra.mxu0 0.0
    %335 = vmatpush.msra.mxu0 0.0
    %336 = vmatpush.msra.mxu0 0.0
    %337 = vmatpush.msra.mxu0 0.0
    %338 = vmatpush.msra.mxu0 0.0
    %339 = vmatpush.msra.mxu0 0.0
    %340 = vmatpush.msra.mxu0 0.0
    %341 = vmatpush.msra.mxu0 0.0
    %342 = vmatpush.msra.mxu0 0.0
    %343 = vmatpush.msra.mxu0 0.0
    %344 = vmatpush.msra.mxu0 0.0
    %345 = vmatpush.msra.mxu0 %v328
    %346 = vmatmul.f32.gmra.mxu0 %v321
    %v347 = vpop.f32.mrf.mxu0
    %v348 = vadd.f32 0.0, %v347
    %349 = vmatmul.f32.gmra.mxu0 %v324
    %v350 = vpop.f32.mrf.mxu0
    %v351 = vadd.f32 0.0, %v350
    %352 = vdwg.mxu0
    %v353 = vmul.f32 %v156, %v348
    %v354 = vmul.f32 %v159, %v351
    %355 = vmatpush.msra.mxu0 0.0
    %356 = vmatpush.msra.mxu0 0.0
    %357 = vmatpush.msra.mxu0 0.0
    %358 = vmatpush.msra.mxu0 0.0
    %359 = vmatpush.msra.mxu0 0.0
    %360 = vmatpush.msra.mxu0 0.0
    %361 = vmatpush.msra.mxu0 0.0
    %362 = vmatpush.msra.mxu0 0.0
    %363 = vmatpush.msra.mxu0 0.0
    %364 = vmatpush.msra.mxu0 0.0
    %365 = vmatpush.msra.mxu0 0.0
    %366 = vmatpush.msra.mxu0 0.0
    %367 = vmatpush.msra.mxu0 0.0
    %368 = vmatpush.msra.mxu0 0.0
    %369 = vmatpush.msra.mxu0 %v354
    %370 = vmatpush.msra.mxu0 %v353
    %371 = vmatmul.f32.gmra.mxu0 %v298
    %v372 = vpop.f32.mrf.mxu0
    %v373 = vadd.f32 0.0, %v372
    %374 = vdwg.mxu0
    %v376 = vsel %vm281, %v318, 0
    %378 = vmatpush.msra.mxu0 0.0
    %379 = vmatpush.msra.mxu0 0.0
    %380 = vmatpush.msra.mxu0 0.0
    %381 = vmatpush.msra.mxu0 0.0
    %382 = vmatpush.msra.mxu0 0.0
    %383 = vmatpush.msra.mxu0 0.0
    %384 = vmatpush.msra.mxu0 0.0
    %385 = vmatpush.msra.mxu0 0.0
    %386 = vmatpush.msra.mxu0 0.0
    %387 = vmatpush.msra.mxu0 0.0
    %388 = vmatpush.msra.mxu0 0.0
    %389 = vmatpush.msra.mxu0 0.0
    %390 = vmatpush.msra.mxu0 0.0
    %391 = vmatpush.msra.mxu0 0.0
    %392 = vmatpush.msra.mxu0 0.0
    %393 = vmatpush.msra.mxu0 %v328
    %394 = vmatmul.f32.gmra.mxu0 %v376
    %v395 = vpop.f32.mrf.mxu0
    %v396 = vadd.f32 0.0, %v395
    %397 = vdwg.mxu0
    %v398 = vrcp.pop %v396
    %v399 = vmul.f32 %v396, %v398
    %v400 = vsub.f32 1.0, %v399
    %v401 = vmul.f32 %v398, %v400
    %v402 = vadd.f32 %v398, %v401
    %vm403 = vweird.f32 %v396
    %vm404 = vweird.f32 %v398
    %vm405 = vmor %vm403, %vm404
    %v406 = vsel %vm405, %v398, %v402
    %v407 = vand.u32 2147483647, %v396
    %vm408 = vcmp.eq.f32.partialorder %v407, 8.507059e+37
    %v409 = vand.u32 %v396, 2147483648
    %v410 = vor.u32 1.1754944e-38, %v409
    %v411 = vsel %vm408, %v410, %v406
    %v412 = vmul.f32 %v373, %v411
    %v413 = vld [vmem:[%s12] sm:$0xff]
    %v414 = vld [vmem:[%s12 + $0x8] sm:$0xff]
    %v415 = vld [vmem:[%s12 + $0x10] sm:$0xff]
    %v416 = vld [vmem:[%s12 + $0x18] sm:$0xff]
    %v417 = vld [vmem:[%s12 + $0x20] sm:$0xff]
    %v418 = vld [vmem:[%s12 + $0x28] sm:$0xff]
    %v419 = vld [vmem:[%s12 + $0x30] sm:$0xff]
    %v420 = vld [vmem:[%s12 + $0x38] sm:$0xff]
    %v421 = vld [vmem:[%s13] sm:$0x1]
    %v423 = vperm.slane %v421, 0
    %v426 = vsel %vm251, %v412, 0
    %428 = vmatpush.msra.mxu0 0.0
    %429 = vmatpush.msra.mxu0 0.0
    %430 = vmatpush.msra.mxu0 0.0
    %431 = vmatpush.msra.mxu0 0.0
    %432 = vmatpush.msra.mxu0 0.0
    %433 = vmatpush.msra.mxu0 0.0
    %434 = vmatpush.msra.mxu0 0.0
    %435 = vmatpush.msra.mxu0 0.0
    %436 = vmatpush.msra.mxu0 %v420
    %437 = vmatpush.msra.mxu0 %v419
    %438 = vmatpush.msra.mxu0 %v418
    %439 = vmatpush.msra.mxu0 %v417
    %440 = vmatpush.msra.mxu0 %v416
    %441 = vmatpush.msra.mxu0 %v415
    %442 = vmatpush.msra.mxu0 %v414
    %443 = vmatpush.msra.mxu0 %v413
    %444 = vmatmul.f32.gmra.mxu0 %v426
    %v445 = vpop.f32.mrf.mxu0
    %v446 = vadd.f32 %v423, %v445
    %447 = vdwg.mxu0
    %v448 = vadd.f32 %v182, %v446
    %vm449 = vcmask 254976
    %v450 = vsel %vm449, %v448, 0.0
    %451 = vadd.xlane.f32.xlu0 %v450
    %v452 = vpop.xlane.xlu0 %451
    %v453 = vrcp.pop 32.0
    %v454 = vmul.f32 32.0, %v453
    %v455 = vsub.f32 1.0, %v454
    %v456 = vmul.f32 %v453, %v455
    %v457 = vadd.f32 %v453, %v456
    %vm458 = vweird.f32 %v453
    %v459 = vsel %vm458, %v453, %v457
    %v460 = vmul.f32 %v452, %v459
    %v461 = vsub.f32 %v448, %v460
    %v462 = vmul.f32 %v461, %v461
    %v463 = vsel %vm449, %v462, 0.0
    %464 = vadd.xlane.f32.xlu0 %v463
    %v465 = vpop.xlane.xlu0 %464
    %v466 = vmul.f32 %v465, %v459
    %v467 = vadd.f32 %v466, 1e-05
    %v468 = vrsqrt.pop %v467
    %v469 = vmul.f32 %v468, %v467
    %v470 = vmul.f32 %v469, %v468
    %v471 = vmul.f32 0.5, %v470
    %v472 = vsub.f32 1.5, %v471
    %v473 = vmul.f32 %v468, %v472
    %vm474 = vweird.f32 %v467
    %vm475 = vweird.f32 %v468
    %vm476 = vmor %vm474, %vm475
    %v477 = vsel %vm476, %v468, %v473
    %v478 = vmul.f32 %v461, %v477
    %v479 = vld [vmem:[%s14] sm:$0x1]
    %v481 = vperm.slane %v479, 0
    %v483 = vmul.f32 %v478, %v481
    %v484 = vld [vmem:[%s15] sm:$0x1]
    %v486 = vperm.slane %v484, 0
    %v488 = vadd.f32 %v483, %v486
    %v489 = vld [vmem:[%s16] sm:$0xff]
    %v490 = vld [vmem:[%s16 + $0x8] sm:$0xff]
    %v491 = vld [vmem:[%s16 + $0x10] sm:$0xff]
    %v492 = vld [vmem:[%s16 + $0x18] sm:$0xff]
    %v493 = vld [vmem:[%s17] sm:$0x1]
    %v495 = vperm.slane %v493, 0
    %v498 = vsel %vm131, %v488, 0
    %500 = vmatpush.msra.mxu0 0.0
    %501 = vmatpush.msra.mxu0 0.0
    %502 = vmatpush.msra.mxu0 0.0
    %503 = vmatpush.msra.mxu0 0.0
    %504 = vmatpush.msra.mxu0 0.0
    %505 = vmatpush.msra.mxu0 0.0
    %506 = vmatpush.msra.mxu0 0.0
    %507 = vmatpush.msra.mxu0 0.0
    %508 = vmatpush.msra.mxu0 0.0
    %509 = vmatpush.msra.mxu0 0.0
    %510 = vmatpush.msra.mxu0 0.0
    %511 = vmatpush.msra.mxu0 0.0
    %512 = vmatpush.msra.mxu0 %v492
    %513 = vmatpush.msra.mxu0 %v491
    %514 = vmatpush.msra.mxu0 %v490
    %515 = vmatpush.msra.mxu0 %v489
    %516 = vmatmul.f32.gmra.mxu0 %v498
    %v517 = vpop.f32.mrf.mxu0
    %v518 = vadd.f32 %v495, %v517
    %519 = vdwg.mxu0
    %v520 = vmax.f32 %v518, 0.0
    %v521 = vld [vmem:[%s18] sm:$0xff]
    %v522 = vld [vmem:[%s18 + $0x8] sm:$0xff]
    %v523 = vld [vmem:[%s18 + $0x10] sm:$0xff]
    %v524 = vld [vmem:[%s18 + $0x18] sm:$0xff]
    %v525 = vld [vmem:[%s18 + $0x20] sm:$0xff]
    %v526 = vld [vmem:[%s18 + $0x28] sm:$0xff]
    %v527 = vld [vmem:[%s18 + $0x30] sm:$0xff]
    %v528 = vld [vmem:[%s18 + $0x38] sm:$0xff]
    %v529 = vld [vmem:[%s19] sm:$0x1]
    %v531 = vperm.slane %v529, 0
    %v534 = vsel %vm251, %v520, 0
    %536 = vmatpush.msra.mxu0 0.0
    %537 = vmatpush.msra.mxu0 0.0
    %538 = vmatpush.msra.mxu0 0.0
    %539 = vmatpush.msra.mxu0 0.0
    %540 = vmatpush.msra.mxu0 0.0
    %541 = vmatpush.msra.mxu0 0.0
    %542 = vmatpush.msra.mxu0 0.0
    %543 = vmatpush.msra.mxu0 0.0
    %544 = vmatpush.msra.mxu0 %v528
    %545 = vmatpush.msra.mxu0 %v527
    %546 = vmatpush.msra.mxu0 %v526
    %547 = vmatpush.msra.mxu0 %v525
    %548 = vmatpush.msra.mxu0 %v524
    %549 = vmatpush.msra.mxu0 %v523
    %550 = vmatpush.msra.mxu0 %v522
    %551 = vmatpush.msra.mxu0 %v521
    %552 = vmatmul.f32.gmra.mxu0 %v534
    %v553 = vpop.f32.mrf.mxu0
    %v554 = vadd.f32 %v531, %v553
    %555 = vdwg.mxu0
    %v556 = vmax.f32 %v554, 0.0
    %v557 = vld [vmem:[%s20] sm:$0xff]
    %v558 = vld [vmem:[%s20 + $0x8] sm:$0xff]
    %v559 = vld [vmem:[%s20 + $0x10] sm:$0xff]
    %v560 = vld [vmem:[%s20 + $0x18] sm:$0xff]
    %v561 = vld [vmem:[%s21] sm:$0x1]
    %v563 = vperm.slane %v561, 0
    %v566 = vsel %vm131, %v556, 0
    %568 = vmatpush.msra.mxu0 0.0
    %569 = vmatpush.msra.mxu0 0.0
    %570 = vmatpush.msra.mxu0 0.0
    %571 = vmatpush.msra.mxu0 0.0
    %572 = vmatpush.msra.mxu0 0.0
    %573 = vmatpush.msra.mxu0 0.0
    %574 = vmatpush.msra.mxu0 0.0
    %575 = vmatpush.msra.mxu0 0.0
    %576 = vmatpush.msra.mxu0 0.0
    %577 = vmatpush.msra.mxu0 0.0
    %578 = vmatpush.msra.mxu0 0.0
    %579 = vmatpush.msra.mxu0 0.0
    %580 = vmatpush.msra.mxu0 %v560
    %581 = vmatpush.msra.mxu0 %v559
    %582 = vmatpush.msra.mxu0 %v558
    %583 = vmatpush.msra.mxu0 %v557
    %584 = vmatmul.f32.gmra.mxu0 %v566
    %v585 = vpop.f32.mrf.mxu0
    %v586 = vadd.f32 %v563, %v585
    %587 = vdwg.mxu0
    %588 = vst [vmem:[#allocation2] sm:$0x3] %v586
    // Predicated region
    $region90: #{tpu_custom_call.1} parent=1 // pred_check
      _
    $region91: #{tpu_custom_call.1} parent=1 // pred_check_branch
      %590 = sbr.rel (0) target = $region93
    $region92: #{tpu_custom_call.1} parent=1 // pred_region
      %592 = vsyncadd [#allocation3], 0
      %s594 = sshll.u32 [#allocation2], 4
      %s595 = int_to_ptr.vmem [resolvable:$true] %s594
      %s596 = sshll.u32 %s22, 4
      %s597 = int_to_ptr.hbm [resolvable:$true] %s596
      %599 = dma.vmem_to_hbm [thread:$0]  %s595, 32, %s597, [#allocation3]
    $region93: #{tpu_custom_call.1} parent=1 // pred_fallthru
      _
    // Predicated region
    $region94: #{tpu_custom_call.1} parent=1 // pred_check
      _
    $region95: #{tpu_custom_call.1} parent=1 // pred_check_branch
      %601 = sbr.rel (0) target = $region97
    $region96: #{tpu_custom_call.1} parent=1 // pred_region
      %603 = dma.done [#allocation3], 32
    $region97: #{tpu_custom_call.1} parent=1 // pred_fallthru
      _
    %604 = vsyncpa [#allocation3], 1

</llo_original>
